<compile_context>
chip_gen: v5e
topology: v5e:2x2
jax: 0.10.0
libtpu: 0.0.40
codegen_flags: <defaults>
</compile_context>

<pallas_src>
import functools

import jax
import jax.numpy as jnp
from jax.experimental import pallas as pl
from jax.experimental.pallas import tpu as pltpu


def _find_multiple(n: int, k: int) -> int:
    if n % k == 0:
        return n
    return n + k - n % k


def _round_up(n: int, k: int) -> int:
    return ((n + k - 1) // k) * k


def _sublane(dtype) -> int:
    return 16 if jnp.dtype(dtype) == jnp.dtype(jnp.bfloat16) else 8


def _tpu_vmem_capacity_bytes() -> int:
    try:
        return int(pltpu.get_tpu_info().vmem_capacity_bytes)
    except Exception:
        return 64 << 20  # conservative fallback: v7x per-TC VMEM


def _vmem_budget_bytes() -> int:
    cap = _tpu_vmem_capacity_bytes()
    if cap <= (64 << 20):                      # v7x: cap ~56 MiB per TC
        return max(cap - (8 << 20), 24 << 20)
    return min(cap - (16 << 20), 110 << 20)    # v5e/v6e: use most of 128 MiB


def _vmem_need_bytes(tm: int, th: int, dim: int, x_isz: int, w_isz: int) -> int:
    """Double-buffered VMEM footprint of one grid step, incl. in-kernel temps."""
    x_buf = tm * dim * x_isz
    w13_buf = dim * 2 * th * w_isz
    w2_buf = th * dim * w_isz
    o_buf = tm * dim * x_isz
    acc = tm * dim * 4
    # gu (tm, 2*th) f32, act (tm, th) f32, act cast (tm, th) in weight dtype
    inter = tm * 2 * th * 4 + tm * th * 4 + tm * th * w_isz
    return 2 * (x_buf + w13_buf + w2_buf + o_buf) + acc + inter


def plan_ffn_tiles(M: int, dim: int, hidden: int, x_dtype,
                   w_dtype=jnp.bfloat16, vmem_budget: int | None = None):
    """Pick (tm, th) jointly.  tm is fixed first; th is the largest candidate
    that fits the generation-aware VMEM budget for THAT tm."""
    if vmem_budget is None:
        vmem_budget = _vmem_budget_bytes()
    x_isz = jnp.dtype(x_dtype).itemsize
    w_isz = jnp.dtype(w_dtype).itemsize
    sub = _sublane(x_dtype)

    # Token tile: big for prefill (arithmetic intensity ~ tm flop/byte with
    # weights re-streamed per token tile); keep >= 2 token tiles so both v7x
    # TensorCores get work on small-M (decode) calls.
    tm = min(512, _round_up(M, sub))
    if M > sub:
        tm = min(tm, _round_up((M + 1) // 2, sub))
    tm = max(sub, _round_up(tm, sub))

    hid_cap = _round_up(hidden, 128)
    cands = [c for c in (1024, 512, 256, 128) if c <= hid_cap] or [hid_cap]

    while True:
        for th in cands:
            if _vmem_need_bytes(tm, th, dim, x_isz, w_isz) <= vmem_budget:
                return tm, th, vmem_budget
        if tm <= sub:
            return tm, cands[-1], vmem_budget  # best effort
        tm = max(sub, _round_up(tm // 2, sub))


def prepare_ffn_weights(w1, w3, w2, th: int, *, weight_dtype=jnp.bfloat16):
    """ONE-TIME weight preparation (hoisted out of the per-call path).

    w1, w3: (hidden, dim)  -- PyTorch nn.Linear layout [out_features, in_features]
    w2    : (dim, hidden)

    Casts to bf16 (MXU-fast), zero-pads hidden up to a multiple of th, and
    interleaves [w1^T | w3^T] per hidden tile so one BlockSpec slab feeds both
    projections.  Returns (w13: (dim, 2*hidden_p), w2t: (hidden_p, dim)).
    """
    hidden, dim = w1.shape
    assert w3.shape == (hidden, dim) and w2.shape == (dim, hidden)
    hp = _round_up(hidden, th)
    nh = hp // th

    w1t = w1.T.astype(weight_dtype)
    w3t = w3.T.astype(weight_dtype)
    w2t = w2.T.astype(weight_dtype)
    if hp != hidden:
        pad = hp - hidden
        w1t = jnp.pad(w1t, ((0, 0), (0, pad)))
        w3t = jnp.pad(w3t, ((0, 0), (0, pad)))
        w2t = jnp.pad(w2t, ((0, pad), (0, 0)))

    w13 = jnp.concatenate(
        [w1t.reshape(dim, nh, th), w3t.reshape(dim, nh, th)], axis=2
    ).reshape(dim, nh * 2 * th)
    return w13, w2t


def _ffn_step(x_ref, w13_ref, w2_ref, acc_ref, th: int):
    x = x_ref[...].astype(w13_ref.dtype)                               # bf16 path
    gu = jnp.dot(x, w13_ref[...], preferred_element_type=jnp.float32)  # (tm, 2*th)
    g = gu[:, :th]
    u = gu[:, th:]
    act = (g * jax.nn.sigmoid(g)) * u                                  # SiLU(g) * u, f32
    acc_ref[...] += jnp.dot(act.astype(w2_ref.dtype), w2_ref[...],
                            preferred_element_type=jnp.float32)


def _ffn_kernel_inplace(x_ref, w13_ref, w2_ref, o_ref, *, th: int):
    """f32 output: accumulate directly into the resident output block."""
    @pl.when(pl.program_id(1) == 0)
    def _():
        o_ref[...] = jnp.zeros_like(o_ref)

    _ffn_step(x_ref, w13_ref, w2_ref, o_ref, th)


def _ffn_kernel_scratch(x_ref, w13_ref, w2_ref, o_ref, acc_ref, *, th: int):
    """Non-f32 output: f32 scratch accumulator, cast on the last hidden step."""
    h = pl.program_id(1)

    @pl.when(h == 0)
    def _():
        acc_ref[...] = jnp.zeros_like(acc_ref)

    _ffn_step(x_ref, w13_ref, w2_ref, acc_ref, th)

    @pl.when(h == pl.num_programs(1) - 1)
    def _():
        o_ref[...] = acc_ref[...].astype(o_ref.dtype)


def feed_forward(x, w13, w2t, th: int, *, tm: int, vmem_budget: int | None = None):
    """x: (M, dim); w13: (dim, 2*hidden_p) fused bf16 slab; w2t: (hidden_p, dim)."""
    M, dim = x.shape
    hidden_p = w2t.shape[0]
    assert w13.shape == (dim, 2 * hidden_p)
    assert hidden_p % th == 0
    nh = hidden_p // th

    sub = _sublane(x.dtype)
    tm = max(sub, _round_up(tm, sub))
    if vmem_budget is None:
        vmem_budget = _vmem_budget_bytes()

    x_isz = jnp.dtype(x.dtype).itemsize
    w_isz = jnp.dtype(w13.dtype).itemsize
    # th is baked into the weight layout; if this (tm, th) overflows the budget,
    # shrink tm (never th) until it fits.
    while tm > sub and _vmem_need_bytes(tm, th, dim, x_isz, w_isz) > vmem_budget:
        tm = max(sub, _round_up(tm // 2, sub))

    # Pad ragged token counts; padded rows are zeros and sliced off afterwards.
    Mp = _round_up(M, tm)
    xp = x if Mp == M else jnp.pad(x, ((0, Mp - M), (0, 0)))
    grid = (Mp // tm, nh)

    # Serpentine over the hidden axis: at a token-tile boundary the weight
    # slabs for the last h are reused instead of re-fetched from HBM.
    def w13_map(i, h):
        return (0, h + (i % 2) * (nh - 1 - 2 * h))

    def w2_map(i, h):
        return (h + (i % 2) * (nh - 1 - 2 * h), 0)

    need = _vmem_need_bytes(tm, th, dim, x_isz, w_isz)
    vmem_limit = int(min(max(need + (4 << 20), 32 << 20), vmem_budget))

    cost = pl.CostEstimate(
        flops=6 * Mp * dim * hidden_p,
        transcendentals=Mp * hidden_p,
        # weights are re-streamed once per token tile
        bytes_accessed=(Mp // tm) * 3 * dim * hidden_p * w_isz + 2 * Mp * dim * x_isz,
    )

    if jnp.dtype(x.dtype) == jnp.dtype(jnp.float32):
        kernel = functools.partial(_ffn_kernel_inplace, th=th)
        scratch = []
    else:
        kernel = functools.partial(_ffn_kernel_scratch, th=th)
        scratch = [pltpu.VMEM((tm, dim), jnp.float32)]

    out = pl.pallas_call(
        kernel,
        out_shape=jax.ShapeDtypeStruct((Mp, dim), x.dtype),
        grid_spec=pltpu.PrefetchScalarGridSpec(
            num_scalar_prefetch=0,
            grid=grid,
            in_specs=[
                pl.BlockSpec((tm, dim), lambda i, h: (i, 0)),    # x tile
                pl.BlockSpec((dim, 2 * th), w13_map),            # fused w1|w3 slab
                pl.BlockSpec((th, dim), w2_map),                 # w2^T slab
            ],
            out_specs=pl.BlockSpec((tm, dim), lambda i, h: (i, 0)),
            scratch_shapes=scratch,
        ),
        compiler_params=pltpu.CompilerParams(
            dimension_semantics=("parallel", "arbitrary"),
            vmem_limit_bytes=vmem_limit),
        cost_estimate=cost,
    )(xp, w13, w2t)

    return out[:M] if Mp != M else out


if __name__ == "__main__":
    # Small config: dim=32 -> intermediate = find_multiple(int(2*4*32/3), 256) = 256
    dim = 32
    intermediate = _find_multiple(int(2 * (4 * dim) / 3), 256)  # 256
    batch, seq = 2, 8

    key = jax.random.PRNGKey(0)
    kx, k1, k2, k3 = jax.random.split(key, 4)
    x_bsd = jax.random.normal(kx, (batch, seq, dim), dtype=jnp.float32)
    scale = 0.02
    w1 = scale * jax.random.normal(k1, (intermediate, dim), dtype=jnp.float32)
    w3 = scale * jax.random.normal(k3, (intermediate, dim), dtype=jnp.float32)
    w2 = scale * jax.random.normal(k2, (dim, intermediate), dtype=jnp.float32)

    x = x_bsd.reshape(batch * seq, dim)  # flatten tokens
    M = x.shape[0]

    # Plan tiles once (tm first, then th for that tm), prepare weights once.
    tm, th, budget = plan_ffn_tiles(M, dim, intermediate, x.dtype)
    w13, w2t = prepare_ffn_weights(w1, w3, w2, th)   # bf16, hidden padded to th

    out = feed_forward(x, w13, w2t, th, tm=tm, vmem_budget=budget)
    out = jax.block_until_ready(out).reshape(batch, seq, dim)

    # Reference with the same dtype policy as the kernel (bf16 weights/x,
    # f32 accumulation): PyTorch semantics w2(silu(w1 x) * w3 x).
    bf = jnp.bfloat16
    xb = x.astype(bf)
    g = jnp.dot(xb, w1.astype(bf).T, preferred_element_type=jnp.float32)
    u = jnp.dot(xb, w3.astype(bf).T, preferred_element_type=jnp.float32)
    act = (g * jax.nn.sigmoid(g)) * u
    ref = jnp.dot(act.astype(bf), w2.astype(bf).T,
                  preferred_element_type=jnp.float32).astype(x.dtype)
    ref = ref.reshape(batch, seq, dim)
    assert jnp.allclose(out, ref, atol=2e-3, rtol=2e-2), "mismatch vs reference"

    print("KERNEL_OK")
</pallas_src>

<mosaic_0001>
module attributes {stable_mosaic.version = 11 : i64} {
  func.func @_ffn_kernel_inplace(%arg0: i32, %arg1: i32, %arg2: memref<8x32xf32, #tpu.memory_space<vmem>>, %arg3: memref<32x512xbf16, #tpu.memory_space<vmem>>, %arg4: memref<256x32xbf16, #tpu.memory_space<vmem>>, %arg5: memref<8x32xf32, #tpu.memory_space<vmem>>) attributes {dimension_semantics = [#tpu.dimension_semantics<parallel>, #tpu.dimension_semantics<arbitrary>], iteration_bounds = array<i64: 2, 1>, scalar_prefetch = 0 : i64, scratch_operands = 0 : i64, tpu.core_type = #tpu.core_type<tc>, window_params = [{transform_indices = @transform_0, window_bounds = array<i64: 8, 32>}, {transform_indices = @transform_1, window_bounds = array<i64: 32, 512>}, {transform_indices = @transform_2, window_bounds = array<i64: 256, 32>}, {transform_indices = @transform_3, window_bounds = array<i64: 8, 32>}]} {
    %c0_i32 = arith.constant 0 : i32
    %0 = arith.cmpi eq, %arg1, %c0_i32 : i32
    %1 = arith.extui %0 : i1 to i32
    %c0_i32_0 = arith.constant 0 : i32
    %2 = arith.cmpi ne, %1, %c0_i32_0 : i32
    scf.if %2 {
      %cst_12 = arith.constant 0.000000e+00 : f32
      %22 = vector.broadcast %cst_12 : f32 to vector<8x32xf32>
      %c0_13 = arith.constant 0 : index
      %c0_14 = arith.constant 0 : index
      %23 = vector.load %arg5[%c0_13, %c0_14] : memref<8x32xf32, #tpu.memory_space<vmem>>, vector<8x32xf32>
      tpu.vector_store %arg5[%c0_13, %c0_14], %22 {strides = array<i32>} : memref<8x32xf32, #tpu.memory_space<vmem>>, vector<8x32xf32>,
    } else {
    }
    %c0 = arith.constant 0 : index
    %c0_1 = arith.constant 0 : index
    %3 = vector.load %arg2[%c0, %c0_1] : memref<8x32xf32, #tpu.memory_space<vmem>>, vector<8x32xf32>
    %4 = arith.truncf %3 : vector<8x32xf32> to vector<8x32xbf16>
    %c0_2 = arith.constant 0 : index
    %c0_3 = arith.constant 0 : index
    %5 = vector.load %arg3[%c0_2, %c0_3] : memref<32x512xbf16, #tpu.memory_space<vmem>>, vector<32x512xbf16>
    %cst = arith.constant dense<0.000000e+00> : vector<8x512xf32>
    %6 = tpu.matmul %4, %5, %cst {dimension_numbers = #tpu.dot_dimension_numbers<[1], [0], [0], [1], [0, 0, 1, 1], [], []>} : vector<8x32xbf16>, vector<32x512xbf16>, vector<8x512xf32> -> vector<8x512xf32>
    %7 = vector.extract_strided_slice %6 {offsets = [0, 0], sizes = [8, 256], strides = [1, 1]} : vector<8x512xf32> to vector<8x256xf32>
    %8 = vector.extract_strided_slice %6 {offsets = [0, 256], sizes = [8, 256], strides = [1, 1]} : vector<8x512xf32> to vector<8x256xf32>
    %9 = arith.negf %7 : vector<8x256xf32>
    %10 = math.exp %9 : vector<8x256xf32>
    %cst_4 = arith.constant 1.000000e+00 : f32
    %11 = vector.broadcast %cst_4 : f32 to vector<8x256xf32>
    %12 = arith.addf %11, %10 : vector<8x256xf32>
    %13 = arith.divf %11, %12 : vector<8x256xf32>
    %14 = arith.mulf %7, %13 : vector<8x256xf32>
    %15 = arith.mulf %14, %8 : vector<8x256xf32>
    %c0_5 = arith.constant 0 : index
    %c0_6 = arith.constant 0 : index
    %16 = vector.load %arg5[%c0_5, %c0_6] : memref<8x32xf32, #tpu.memory_space<vmem>>, vector<8x32xf32>
    %17 = arith.truncf %15 : vector<8x256xf32> to vector<8x256xbf16>
    %c0_7 = arith.constant 0 : index
    %c0_8 = arith.constant 0 : index
    %18 = vector.load %arg4[%c0_7, %c0_8] : memref<256x32xbf16, #tpu.memory_space<vmem>>, vector<256x32xbf16>
    %cst_9 = arith.constant dense<0.000000e+00> : vector<8x32xf32>
    %19 = tpu.matmul %17, %18, %cst_9 {dimension_numbers = #tpu.dot_dimension_numbers<[1], [0], [0], [1], [0, 0, 1, 1], [], []>} : vector<8x256xbf16>, vector<256x32xbf16>, vector<8x32xf32> -> vector<8x32xf32>
    %20 = arith.addf %16, %19 : vector<8x32xf32>
    %c0_10 = arith.constant 0 : index
    %c0_11 = arith.constant 0 : index
    %21 = vector.load %arg5[%c0_10, %c0_11] : memref<8x32xf32, #tpu.memory_space<vmem>>, vector<8x32xf32>
    tpu.vector_store %arg5[%c0_10, %c0_11], %20 {strides = array<i32>} : memref<8x32xf32, #tpu.memory_space<vmem>>, vector<8x32xf32>,
    return
  }
  func.func @transform_0(%arg0: i32, %arg1: i32) -> (i32, i32) {
    %c0_i32 = arith.constant 0 : i32
    %c0_i32_0 = arith.constant 0 : i32
    return %arg0, %c0_i32 : i32, i32
  }
  func.func @transform_1(%arg0: i32, %arg1: i32) -> (i32, i32) {
    %c2_i32 = arith.constant 2 : i32
    %c0_i32 = arith.constant 0 : i32
    %0 = arith.cmpi eq, %c2_i32, %c0_i32 : i32
    %c1_i32 = arith.constant 1 : i32
    %1 = arith.select %0, %c1_i32, %c2_i32 : i32
    %2 = arith.remsi %arg0, %1 : i32
    %c0_i32_0 = arith.constant 0 : i32
    %3 = arith.cmpi ne, %2, %c0_i32_0 : i32
    %c0_i32_1 = arith.constant 0 : i32
    %4 = arith.cmpi slt, %2, %c0_i32_1 : i32
    %c0_i32_2 = arith.constant 0 : i32
    %5 = arith.cmpi slt, %1, %c0_i32_2 : i32
    %6 = arith.xori %4, %5 : i1
    %7 = arith.andi %6, %3 : i1
    %8 = arith.addi %2, %1 : i32
    %9 = arith.select %7, %8, %2 : i32
    %c2_i32_3 = arith.constant 2 : i32
    %10 = arith.muli %c2_i32_3, %arg1 : i32
    %c0_i32_4 = arith.constant 0 : i32
    %11 = arith.subi %c0_i32_4, %10 : i32
    %12 = arith.muli %9, %11 : i32
    %13 = arith.addi %arg1, %12 : i32
    %c0_i32_5 = arith.constant 0 : i32
    %c0_i32_6 = arith.constant 0 : i32
    return %c0_i32_5, %13 : i32, i32
  }
  func.func @transform_2(%arg0: i32, %arg1: i32) -> (i32, i32) {
    %c2_i32 = arith.constant 2 : i32
    %c0_i32 = arith.constant 0 : i32
    %0 = arith.cmpi eq, %c2_i32, %c0_i32 : i32
    %c1_i32 = arith.constant 1 : i32
    %1 = arith.select %0, %c1_i32, %c2_i32 : i32
    %2 = arith.remsi %arg0, %1 : i32
    %c0_i32_0 = arith.constant 0 : i32
    %3 = arith.cmpi ne, %2, %c0_i32_0 : i32
    %c0_i32_1 = arith.constant 0 : i32
    %4 = arith.cmpi slt, %2, %c0_i32_1 : i32
    %c0_i32_2 = arith.constant 0 : i32
    %5 = arith.cmpi slt, %1, %c0_i32_2 : i32
    %6 = arith.xori %4, %5 : i1
    %7 = arith.andi %6, %3 : i1
    %8 = arith.addi %2, %1 : i32
    %9 = arith.select %7, %8, %2 : i32
    %c2_i32_3 = arith.constant 2 : i32
    %10 = arith.muli %c2_i32_3, %arg1 : i32
    %c0_i32_4 = arith.constant 0 : i32
    %11 = arith.subi %c0_i32_4, %10 : i32
    %12 = arith.muli %9, %11 : i32
    %13 = arith.addi %arg1, %12 : i32
    %c0_i32_5 = arith.constant 0 : i32
    %c0_i32_6 = arith.constant 0 : i32
    return %13, %c0_i32_5 : i32, i32
  }
  func.func @transform_3(%arg0: i32, %arg1: i32) -> (i32, i32) {
    %c0_i32 = arith.constant 0 : i32
    %c0_i32_0 = arith.constant 0 : i32
    return %arg0, %c0_i32 : i32, i32
  }
}

</mosaic_0001>

<llo_original>
// kernel: tpu_custom_call.1
$region0: #{tpu_custom_call.1}
  #allocation0 [shape = 'u32[]', space=smem, size = 0x4, offset = 0x4, fixed_abs, tag = 'smem constant byte address 0x4 - core index']
  #allocation1 [shape = 'u32[72,128]{1,0:T(1,128)}', space=vmem, size = 0x9000, scoped, tag = 'internal scratch']
  %s0 = inlined_call_operand.vmem [shape: f32[16,32], index: 0, kind: input, shape index: {}]
  %s1 = inlined_call_operand.vmem [shape: bf16[32,512], index: 1, kind: input, shape index: {}]
  %s2 = inlined_call_operand.vmem [shape: bf16[256,32], index: 2, kind: input, shape index: {}]
  %s3 = inlined_call_operand.hbm [shape: f32[16,32], index: 3, kind: output, shape index: {}]
  %s4 = sld [smem:[#allocation0]]
  $region49: #{tpu_custom_call.1} parent=0
    _
  %s6 = ssub.s32 1, %s4
  %s7 = scalar_select 0, %s6, %s4
  $region1: #{tpu_custom_call.1} parent=0
    #allocation2 [shape = 'u8[8192]{0}', space=vmem, size = 0x2000, scoped, tag = 'output window, operand 0']
    #allocation3 [shape = 's32[2]{0}', space=sflag, size = 0x8, scoped, tag = 'scoped memory for tpu_custom_call.1']
    %8 = vsyncpa [#allocation3], 0
    %s9 = scalar_lea.sflag [#allocation3], 1
    %10 = vsyncpa %s9, 0
    loop: start=0, step=1, limit=4
    $region2: #{tpu_custom_call.1} parent=1 // loop_pre_header
      _
    $region3: #{tpu_custom_call.1} parent=1 // loop_header
      %s12 = sphi 0, %s16
      %p13 = scmp.ge.s32.totalorder %s12, 4
      %s19 = sphi 0, %s31
      %s20 = sphi 0, %s27
      %s21 = sphi 0, %s19
      %s22 = sphi 0, %s20
      %s23 = sphi 0, %s21
      %s24 = sphi 0, %s22
      %s34 = sphi 0, %s36
      %s37 = sphi 0, %s34
      %s38 = sphi 0, %s37
      %s54 = sphi 0, %s38
      %s92 = sphi 0, %s94
      %s95 = sphi 0, %s92
      %s96 = sphi 0, %s95
      %s112 = sphi 0, %s96
      %s150 = sphi 0, %s152
      %s153 = sphi 0, %s150
      %s154 = sphi 0, %s153
      %s170 = sphi 0, %s154
      %s176 = sphi 0, %s178
      %s179 = sphi 0, %s176
      %s180 = sphi 0, %s179
      %s196 = sphi 0, %s180
    $region4: #{tpu_custom_call.1} parent=1 // loop_header_branch
      %15 = sbr.rel (%p13) target = $region8
    $region5: #{tpu_custom_call.1} parent=1 // loop_body
      %s17 = ssub.s32 %s12, 1
      %s18 = ssub.s32 %s12, 2
      %s25 = sadd.s32 1, %s20
      %p26 = scmp.ge.s32.totalorder %s25, 1
      %s27 = scalar_select %p26, 0, %s25
      %s28 = sadd.s32 1, %s19
      %s29 = scalar_select %p26, %s28, %s19
      %p30 = scmp.ge.s32.totalorder %s29, 2
      %s31 = scalar_select %p30, 0, %s29
      %s32 = ssub.s32 %s19, %s31
      %p33 = scmp.eq.s32.totalorder %s32, 0
      %s35 = sadd.s32 %s34, 1
      %s36 = scalar_select %p33, %s34, %s35
      %p39 = pneg %p33
      %p40 = scmp.eq.s32.totalorder %s12, 1
      %p41 = por %p39, %p40
      %p42 = scmp.ne.s32.totalorder %s34, %s37
      %p43 = scmp.eq.s32.totalorder %s12, 0
      %p44 = por %p42, %p43
      %p45 = scmp.ne.s32.totalorder %s34, %s37
      %p46 = scmp.eq.s32.totalorder %s17, 1
      %p47 = por %p45, %p46
      %p48 = scmp.ne.s32.totalorder %s37, %s38
      %p49 = scmp.eq.s32.totalorder %s17, 0
      %p50 = por %p48, %p49
      %p51 = scmp.ne.s32.totalorder %s37, %s38
      %p52 = scmp.eq.s32.totalorder %s18, 1
      %p53 = por %p51, %p52
      %p55 = scmp.ne.s32.totalorder %s38, %s54
      %p56 = scmp.eq.s32.totalorder %s18, 0
      %p57 = por %p55, %p56
      %p58 = scmp.lt.s32.totalorder %s19, 0
      %s59 = ssub.s32 0, %s19
      %s60 = scalar_select %p58, %s59, %s19
      %s61 = sand.u32 %s60, 1
      %s62 = ssub.s32 0, %s61
      %s63 = scalar_select %p58, %s62, %s61
      %p64 = scmp.ne.s32.totalorder %s63, 0
      %p65 = scmp.lt.s32.totalorder %s63, 0
      %p66 = pnand %p65, %p64
      %p67 = pneg %p66
      %s68 = sadd.s32 %s63, 2
      %s69 = scalar_select %p67, %s68, %s63
      %s70 = smul.u32 %s20, 2
      %s71 = ssub.s32 0, %s70
      %s72 = smul.u32 %s69, %s71
      %s73 = sadd.s32 %s20, %s72
      %p74 = scmp.lt.s32.totalorder %s31, 0
      %s75 = ssub.s32 0, %s31
      %s76 = scalar_select %p74, %s75, %s31
      %s77 = sand.u32 %s76, 1
      %s78 = ssub.s32 0, %s77
      %s79 = scalar_select %p74, %s78, %s77
      %p80 = scmp.ne.s32.totalorder %s79, 0
      %p81 = scmp.lt.s32.totalorder %s79, 0
      %p82 = pnand %p81, %p80
      %p83 = pneg %p82
      %s84 = sadd.s32 %s79, 2
      %s85 = scalar_select %p83, %s84, %s79
      %s86 = smul.u32 %s27, 2
      %s87 = ssub.s32 0, %s86
      %s88 = smul.u32 %s85, %s87
      %s89 = sadd.s32 %s27, %s88
      %s90 = ssub.s32 %s73, %s89
      %p91 = scmp.eq.s32.totalorder %s90, 0
      %s93 = sadd.s32 %s92, 1
      %s94 = scalar_select %p91, %s92, %s93
      %p97 = pneg %p91
      %p98 = scmp.eq.s32.totalorder %s12, 1
      %p99 = por %p97, %p98
      %p100 = scmp.ne.s32.totalorder %s92, %s95
      %p101 = scmp.eq.s32.totalorder %s12, 0
      %p102 = por %p100, %p101
      %p103 = scmp.ne.s32.totalorder %s92, %s95
      %p104 = scmp.eq.s32.totalorder %s17, 1
      %p105 = por %p103, %p104
      %p106 = scmp.ne.s32.totalorder %s95, %s96
      %p107 = scmp.eq.s32.totalorder %s17, 0
      %p108 = por %p106, %p107
      %p109 = scmp.ne.s32.totalorder %s95, %s96
      %p110 = scmp.eq.s32.totalorder %s18, 1
      %p111 = por %p109, %p110
      %p113 = scmp.ne.s32.totalorder %s96, %s112
      %p114 = scmp.eq.s32.totalorder %s18, 0
      %p115 = por %p113, %p114
      %p116 = scmp.lt.s32.totalorder %s19, 0
      %s117 = ssub.s32 0, %s19
      %s118 = scalar_select %p116, %s117, %s19
      %s119 = sand.u32 %s118, 1
      %s120 = ssub.s32 0, %s119
      %s121 = scalar_select %p116, %s120, %s119
      %p122 = scmp.ne.s32.totalorder %s121, 0
      %p123 = scmp.lt.s32.totalorder %s121, 0
      %p124 = pnand %p123, %p122
      %p125 = pneg %p124
      %s126 = sadd.s32 %s121, 2
      %s127 = scalar_select %p125, %s126, %s121
      %s128 = smul.u32 %s20, 2
      %s129 = ssub.s32 0, %s128
      %s130 = smul.u32 %s127, %s129
      %s131 = sadd.s32 %s20, %s130
      %p132 = scmp.lt.s32.totalorder %s31, 0
      %s133 = ssub.s32 0, %s31
      %s134 = scalar_select %p132, %s133, %s31
      %s135 = sand.u32 %s134, 1
      %s136 = ssub.s32 0, %s135
      %s137 = scalar_select %p132, %s136, %s135
      %p138 = scmp.ne.s32.totalorder %s137, 0
      %p139 = scmp.lt.s32.totalorder %s137, 0
      %p140 = pnand %p139, %p138
      %p141 = pneg %p140
      %s142 = sadd.s32 %s137, 2
      %s143 = scalar_select %p141, %s142, %s137
      %s144 = smul.u32 %s27, 2
      %s145 = ssub.s32 0, %s144
      %s146 = smul.u32 %s143, %s145
      %s147 = sadd.s32 %s27, %s146
      %s148 = ssub.s32 %s131, %s147
      %p149 = scmp.eq.s32.totalorder %s148, 0
      %s151 = sadd.s32 %s150, 1
      %s152 = scalar_select %p149, %s150, %s151
      %p155 = pneg %p149
      %p156 = scmp.eq.s32.totalorder %s12, 1
      %p157 = por %p155, %p156
      %p158 = scmp.ne.s32.totalorder %s150, %s153
      %p159 = scmp.eq.s32.totalorder %s12, 0
      %p160 = por %p158, %p159
      %p161 = scmp.ne.s32.totalorder %s150, %s153
      %p162 = scmp.eq.s32.totalorder %s17, 1
      %p163 = por %p161, %p162
      %p164 = scmp.ne.s32.totalorder %s153, %s154
      %p165 = scmp.eq.s32.totalorder %s17, 0
      %p166 = por %p164, %p165
      %p167 = scmp.ne.s32.totalorder %s153, %s154
      %p168 = scmp.eq.s32.totalorder %s18, 1
      %p169 = por %p167, %p168
      %p171 = scmp.ne.s32.totalorder %s154, %s170
      %p172 = scmp.eq.s32.totalorder %s18, 0
      %p173 = por %p171, %p172
      %s174 = ssub.s32 %s19, %s31
      %p175 = scmp.eq.s32.totalorder %s174, 0
      %s177 = sadd.s32 %s176, 1
      %s178 = scalar_select %p175, %s176, %s177
      %p181 = pneg %p175
      %p182 = scmp.eq.s32.totalorder %s12, 1
      %p183 = por %p181, %p182
      %p184 = scmp.ne.s32.totalorder %s176, %s179
      %p185 = scmp.eq.s32.totalorder %s12, 0
      %p186 = por %p184, %p185
      %p187 = scmp.ne.s32.totalorder %s176, %s179
      %p188 = scmp.eq.s32.totalorder %s17, 1
      %p189 = por %p187, %p188
      %p190 = scmp.ne.s32.totalorder %s179, %s180
      %p191 = scmp.eq.s32.totalorder %s17, 0
      %p192 = por %p190, %p191
      %p193 = scmp.ne.s32.totalorder %s179, %s180
      %p194 = scmp.eq.s32.totalorder %s18, 1
      %p195 = por %p193, %p194
      %p197 = scmp.ne.s32.totalorder %s180, %s196
      %p198 = scmp.eq.s32.totalorder %s18, 0
      %p199 = por %p197, %p198
      %p200 = scmp.le.s32.totalorder 1, %s12
      %p201 = scmp.lt.s32.totalorder %s12, 3
      %p202 = pnand %p200, %p201
      %p203 = pneg %p202
      // Predicated region
      $region9: #{tpu_custom_call.1} parent=5 // pred_check
        _
      $region10: #{tpu_custom_call.1} parent=5 // pred_check_branch
        %205 = sbr.rel (%p202) target = $region12
      $region11: #{tpu_custom_call.1} parent=5 // pred_region
        %s206 = ssub.s32 %s12, 1
      $region12: #{tpu_custom_call.1} parent=5 // pred_fallthru
        _
      %p207 = scmp.lt.s32.totalorder %s12, 2
      // Predicated region
      $region13: #{tpu_custom_call.1} parent=5 // pred_check
        %p208 = pneg %p207
      $region14: #{tpu_custom_call.1} parent=5 // pred_check_branch
        %210 = sbr.rel (%p208) target = $region16
      $region15: #{tpu_custom_call.1} parent=5 // pred_region
        // Predicated region
        $region17: #{tpu_custom_call.1} parent=15 // pred_check
          %p211 = pneg %p44
        $region18: #{tpu_custom_call.1} parent=15 // pred_check_branch
          %213 = sbr.rel (%p211) target = $region20
        $region19: #{tpu_custom_call.1} parent=15 // pred_region
          %p214 = scmp.lt.s32.totalorder %s19, 1
          %s215 = scalar_select %p214, %s19, 1
          %s216 = smul.addr %s215, 8
          %s217 = scalar_lea.vmem %s0, %s216
        $region20: #{tpu_custom_call.1} parent=15 // pred_fallthru
          _
        // Predicated region
        $region21: #{tpu_custom_call.1} parent=15 // pred_check
          %p218 = pneg %p102
        $region22: #{tpu_custom_call.1} parent=15 // pred_check_branch
          %220 = sbr.rel (%p218) target = $region24
        $region23: #{tpu_custom_call.1} parent=15 // pred_region
          %p221 = scmp.lt.s32.totalorder %s19, 0
          %s222 = ssub.s32 0, %s19
          %s223 = scalar_select %p221, %s222, %s19
          %s224 = sand.u32 %s223, 1
          %s225 = ssub.s32 0, %s224
          %s226 = scalar_select %p221, %s225, %s224
          %p227 = scmp.ne.s32.totalorder %s226, 0
          %p228 = scmp.lt.s32.totalorder %s226, 0
          %p229 = pnand %p228, %p227
          %p230 = pneg %p229
          %s231 = sadd.s32 %s226, 2
          %s232 = scalar_select %p230, %s231, %s226
          %s233 = smul.u32 %s20, 2
          %s234 = ssub.s32 0, %s233
          %s235 = smul.u32 %s232, %s234
          %s236 = sadd.s32 %s20, %s235
          %s237 = smul.u32 4, %s236
          %p238 = scmp.lt.s32.totalorder %s237, 3
          %s239 = scalar_select %p238, %s237, 3
          %s240 = smul.addr %s239, 4
          %s241 = scalar_lea.vmem %s1, %s240
          %p242 = scmp.lt.s32.totalorder %s19, 0
          %s243 = ssub.s32 0, %s19
          %s244 = scalar_select %p242, %s243, %s19
          %s245 = sand.u32 %s244, 1
          %s246 = ssub.s32 0, %s245
          %s247 = scalar_select %p242, %s246, %s245
          %p248 = scmp.ne.s32.totalorder %s247, 0
          %p249 = scmp.lt.s32.totalorder %s247, 0
          %p250 = pnand %p249, %p248
          %p251 = pneg %p250
          %s252 = sadd.s32 %s247, 2
          %s253 = scalar_select %p251, %s252, %s247
          %s254 = smul.u32 %s20, 2
          %s255 = ssub.s32 0, %s254
          %s256 = smul.u32 %s253, %s255
          %s257 = sadd.s32 %s20, %s256
          %s258 = smul.u32 4, %s257
        $region24: #{tpu_custom_call.1} parent=15 // pred_fallthru
          _
        // Predicated region
        $region25: #{tpu_custom_call.1} parent=15 // pred_check
          %p259 = pneg %p160
        $region26: #{tpu_custom_call.1} parent=15 // pred_check_branch
          %261 = sbr.rel (%p259) target = $region28
        $region27: #{tpu_custom_call.1} parent=15 // pred_region
          %p262 = scmp.lt.s32.totalorder %s19, 0
          %s263 = ssub.s32 0, %s19
          %s264 = scalar_select %p262, %s263, %s19
          %s265 = sand.u32 %s264, 1
          %s266 = ssub.s32 0, %s265
          %s267 = scalar_select %p262, %s266, %s265
          %p268 = scmp.ne.s32.totalorder %s267, 0
          %p269 = scmp.lt.s32.totalorder %s267, 0
          %p270 = pnand %p269, %p268
          %p271 = pneg %p270
          %s272 = sadd.s32 %s267, 2
          %s273 = scalar_select %p271, %s272, %s267
          %s274 = smul.u32 %s20, 2
          %s275 = ssub.s32 0, %s274
          %s276 = smul.u32 %s273, %s275
          %s277 = sadd.s32 %s20, %s276
          %s278 = smul.u32 32, %s277
          %p279 = scmp.lt.s32.totalorder %s278, 31
          %s280 = scalar_select %p279, %s278, 31
          %s281 = smul.addr %s280, 4
          %s282 = scalar_lea.vmem %s2, %s281
          %p283 = scmp.lt.s32.totalorder %s19, 0
          %s284 = ssub.s32 0, %s19
          %s285 = scalar_select %p283, %s284, %s19
          %s286 = sand.u32 %s285, 1
          %s287 = ssub.s32 0, %s286
          %s288 = scalar_select %p283, %s287, %s286
          %p289 = scmp.ne.s32.totalorder %s288, 0
          %p290 = scmp.lt.s32.totalorder %s288, 0
          %p291 = pnand %p290, %p289
          %p292 = pneg %p291
          %s293 = sadd.s32 %s288, 2
          %s294 = scalar_select %p292, %s293, %s288
          %s295 = smul.u32 %s20, 2
          %s296 = ssub.s32 0, %s295
          %s297 = smul.u32 %s294, %s296
          %s298 = sadd.s32 %s20, %s297
          %s299 = smul.u32 32, %s298
        $region28: #{tpu_custom_call.1} parent=15 // pred_fallthru
          _
      $region16: #{tpu_custom_call.1} parent=5 // pred_fallthru
        _
      %p300 = scmp.le.s32.totalorder 1, %s12
      %p301 = scmp.lt.s32.totalorder %s12, 3
      %p302 = pnand %p300, %p301
      %p303 = pneg %p302
      // Predicated region
      $region29: #{tpu_custom_call.1} parent=5 // pred_check
        _
      $region30: #{tpu_custom_call.1} parent=5 // pred_check_branch
        %305 = sbr.rel (%p302) target = $region32
      $region31: #{tpu_custom_call.1} parent=5 // pred_region
        %s306 = ssub.s32 %s12, 1
        %p307 = scmp.lt.s32.totalorder %s21, 1
        %s308 = scalar_select %p307, %s21, 1
        %s309 = smul.addr %s308, 8
        %s310 = scalar_lea.vmem %s0, %s309
        %p311 = pneg %p50
        %p312 = pneg %p47
        %p313 = scmp.lt.s32.totalorder %s21, 0
        %s314 = ssub.s32 0, %s21
        %s315 = scalar_select %p313, %s314, %s21
        %s316 = sand.u32 %s315, 1
        %s317 = ssub.s32 0, %s316
        %s318 = scalar_select %p313, %s317, %s316
        %p319 = scmp.ne.s32.totalorder %s318, 0
        %p320 = scmp.lt.s32.totalorder %s318, 0
        %p321 = pnand %p320, %p319
        %p322 = pneg %p321
        %s323 = sadd.s32 %s318, 2
        %s324 = scalar_select %p322, %s323, %s318
        %s325 = smul.u32 %s22, 2
        %s326 = ssub.s32 0, %s325
        %s327 = smul.u32 %s324, %s326
        %s328 = sadd.s32 %s22, %s327
        %s329 = smul.u32 4, %s328
        %p330 = scmp.lt.s32.totalorder %s329, 3
        %s331 = scalar_select %p330, %s329, 3
        %s332 = smul.addr %s331, 4
        %s333 = scalar_lea.vmem %s1, %s332
        %p334 = pneg %p108
        %p335 = pneg %p105
        %p336 = scmp.lt.s32.totalorder %s21, 0
        %s337 = ssub.s32 0, %s21
        %s338 = scalar_select %p336, %s337, %s21
        %s339 = sand.u32 %s338, 1
        %s340 = ssub.s32 0, %s339
        %s341 = scalar_select %p336, %s340, %s339
        %p342 = scmp.ne.s32.totalorder %s341, 0
        %p343 = scmp.lt.s32.totalorder %s341, 0
        %p344 = pnand %p343, %p342
        %p345 = pneg %p344
        %s346 = sadd.s32 %s341, 2
        %s347 = scalar_select %p345, %s346, %s341
        %s348 = smul.u32 %s22, 2
        %s349 = ssub.s32 0, %s348
        %s350 = smul.u32 %s347, %s349
        %s351 = sadd.s32 %s22, %s350
        %s352 = smul.u32 32, %s351
        %p353 = scmp.lt.s32.totalorder %s352, 31
        %s354 = scalar_select %p353, %s352, 31
        %s355 = smul.addr %s354, 4
        %s356 = scalar_lea.vmem %s2, %s355
        %p357 = pneg %p166
        %p358 = pneg %p163
        %p359 = pneg %p192
        %p360 = pneg %p189
        %s361 = sand.u32 %s179, 1
        %s362 = scalar_lea.sflag [#allocation3], %s361
        %s363 = sand.u32 %s179, 1
        %s364 = smul.addr %s363, 8
        %s365 = scalar_lea.vmem [#allocation2], %s364
        %p366 = scmp.lt.s32.totalorder %s21, 1
        %s367 = scalar_select %p366, %s21, 1
        %s368 = smul.addr %s367, 8
        %s369 = scalar_lea.vmem %s0, %s368
        %p370 = scmp.lt.s32.totalorder %s21, 0
        %s371 = ssub.s32 0, %s21
        %s372 = scalar_select %p370, %s371, %s21
        %s373 = sand.u32 %s372, 1
        %s374 = ssub.s32 0, %s373
        %s375 = scalar_select %p370, %s374, %s373
        %p376 = scmp.ne.s32.totalorder %s375, 0
        %p377 = scmp.lt.s32.totalorder %s375, 0
        %p378 = pnand %p377, %p376
        %p379 = pneg %p378
        %s380 = sadd.s32 %s375, 2
        %s381 = scalar_select %p379, %s380, %s375
        %s382 = smul.u32 %s22, 2
        %s383 = ssub.s32 0, %s382
        %s384 = smul.u32 %s381, %s383
        %s385 = sadd.s32 %s22, %s384
        %s386 = smul.u32 4, %s385
        %p387 = scmp.lt.s32.totalorder %s386, 3
        %s388 = scalar_select %p387, %s386, 3
        %s389 = smul.addr %s388, 4
        %s390 = scalar_lea.vmem %s1, %s389
        %p391 = scmp.lt.s32.totalorder %s21, 0
        %s392 = ssub.s32 0, %s21
        %s393 = scalar_select %p391, %s392, %s21
        %s394 = sand.u32 %s393, 1
        %s395 = ssub.s32 0, %s394
        %s396 = scalar_select %p391, %s395, %s394
        %p397 = scmp.ne.s32.totalorder %s396, 0
        %p398 = scmp.lt.s32.totalorder %s396, 0
        %p399 = pnand %p398, %p397
        %p400 = pneg %p399
        %s401 = sadd.s32 %s396, 2
        %s402 = scalar_select %p400, %s401, %s396
        %s403 = smul.u32 %s22, 2
        %s404 = ssub.s32 0, %s403
        %s405 = smul.u32 %s402, %s404
        %s406 = sadd.s32 %s22, %s405
        %s407 = smul.u32 4, %s406
        %p408 = scmp.lt.s32.totalorder %s21, 0
        %s409 = ssub.s32 0, %s21
        %s410 = scalar_select %p408, %s409, %s21
        %s411 = sand.u32 %s410, 1
        %s412 = ssub.s32 0, %s411
        %s413 = scalar_select %p408, %s412, %s411
        %p414 = scmp.ne.s32.totalorder %s413, 0
        %p415 = scmp.lt.s32.totalorder %s413, 0
        %p416 = pnand %p415, %p414
        %p417 = pneg %p416
        %s418 = sadd.s32 %s413, 2
        %s419 = scalar_select %p417, %s418, %s413
        %s420 = smul.u32 %s22, 2
        %s421 = ssub.s32 0, %s420
        %s422 = smul.u32 %s419, %s421
        %s423 = sadd.s32 %s22, %s422
        %s424 = smul.u32 32, %s423
        %p425 = scmp.lt.s32.totalorder %s424, 31
        %s426 = scalar_select %p425, %s424, 31
        %s427 = smul.addr %s426, 4
        %s428 = scalar_lea.vmem %s2, %s427
        %p429 = scmp.lt.s32.totalorder %s21, 0
        %s430 = ssub.s32 0, %s21
        %s431 = scalar_select %p429, %s430, %s21
        %s432 = sand.u32 %s431, 1
        %s433 = ssub.s32 0, %s432
        %s434 = scalar_select %p429, %s433, %s432
        %p435 = scmp.ne.s32.totalorder %s434, 0
        %p436 = scmp.lt.s32.totalorder %s434, 0
        %p437 = pnand %p436, %p435
        %p438 = pneg %p437
        %s439 = sadd.s32 %s434, 2
        %s440 = scalar_select %p438, %s439, %s434
        %s441 = smul.u32 %s22, 2
        %s442 = ssub.s32 0, %s441
        %s443 = smul.u32 %s440, %s442
        %s444 = sadd.s32 %s22, %s443
        %s445 = smul.u32 32, %s444
        %p447 = scmp.eq.s32.totalorder %s22, 0
        // Predicated region
        $region33: #{tpu_custom_call.1} parent=31 // pred_check
          %p448 = pneg %p447
        $region34: #{tpu_custom_call.1} parent=31 // pred_check_branch
          %450 = sbr.rel (%p448) target = $region36
        $region35: #{tpu_custom_call.1} parent=31 // pred_region
          %vm451 = vcmask 261120
          %452 = vst.msk [vmem:[%s365] sm:$0xff] %vm451, 0.0
        $region36: #{tpu_custom_call.1} parent=31 // pred_fallthru
          _
        %v453 = vld [vmem:[%s369] sm:$0xff]
        %v454 = vpack.c.bf16 %v453, %v453
        %v455 = vld [vmem:[%s390] sm:$0xff]
        %v456 = vld [vmem:[%s390 + $0x8] sm:$0xff]
        %v457 = vld [vmem:[%s390 + $0x10] sm:$0xff]
        %v458 = vld [vmem:[%s390 + $0x18] sm:$0xff]
        %v459 = vld [vmem:[%s390 + $0x20] sm:$0xff]
        %v460 = vld [vmem:[%s390 + $0x28] sm:$0xff]
        %v461 = vld [vmem:[%s390 + $0x30] sm:$0xff]
        %v462 = vld [vmem:[%s390 + $0x38] sm:$0xff]
        %v471 = vunpack.c.l.b16 %v455
        %v472 = vunpack.c.h.b16 %v455
        %v473 = vunpack.c.l.b16 %v456
        %v474 = vunpack.c.h.b16 %v456
        %v475 = vunpack.c.l.b16 %v457
        %v476 = vunpack.c.h.b16 %v457
        %v477 = vunpack.c.l.b16 %v458
        %v478 = vunpack.c.h.b16 %v458
        %v479 = vunpack.c.l.b16 %v459
        %v480 = vunpack.c.h.b16 %v459
        %v481 = vunpack.c.l.b16 %v460
        %v482 = vunpack.c.h.b16 %v460
        %v483 = vunpack.c.l.b16 %v461
        %v484 = vunpack.c.h.b16 %v461
        %v485 = vunpack.c.l.b16 %v462
        %v486 = vunpack.c.h.b16 %v462
        %v487 = vpack.c.b16 %v475, %v471
        %v488 = vpack.c.b16 %v476, %v472
        %v489 = vpack.c.b16 %v477, %v473
        %v490 = vpack.c.b16 %v478, %v474
        %v491 = vpack.c.b16 %v483, %v479
        %v492 = vpack.c.b16 %v484, %v480
        %v493 = vpack.c.b16 %v485, %v481
        %v494 = vpack.c.b16 %v486, %v482
        %vm503 = vcmask 261120
        %v505 = vsel %vm503, %v454, 0
        %507 = vmatpush.bf16.msra.mxu0 0
        %508 = vmatpush.bf16.msra.mxu0 0
        %509 = vmatpush.bf16.msra.mxu0 0
        %510 = vmatpush.bf16.msra.mxu0 0
        %511 = vmatpush.bf16.msra.mxu0 0
        %512 = vmatpush.bf16.msra.mxu0 0
        %513 = vmatpush.bf16.msra.mxu0 %v491
        %514 = vmatpush.bf16.msra.mxu0 %v487
        %515 = vmatmul.bf16.gmra.mxu0 %v505
        %v516 = vpop.f32.mrf.mxu0
        %v517 = vadd.f32 0.0, %v516
        %v518 = vpop.f32.mrf.mxu0
        %519 = vdwg.mxu0
        %520 = vmatpush.bf16.msra.mxu0 0
        %521 = vmatpush.bf16.msra.mxu0 0
        %522 = vmatpush.bf16.msra.mxu0 0
        %523 = vmatpush.bf16.msra.mxu0 0
        %524 = vmatpush.bf16.msra.mxu0 0
        %525 = vmatpush.bf16.msra.mxu0 0
        %526 = vmatpush.bf16.msra.mxu0 %v492
        %527 = vmatpush.bf16.msra.mxu0 %v488
        %528 = vmatmul.bf16.gmra.mxu0 %v505
        %v529 = vpop.f32.mrf.mxu0
        %v530 = vadd.f32 0.0, %v529
        %v531 = vpop.f32.mrf.mxu0
        %532 = vdwg.mxu0
        %533 = vmatpush.bf16.msra.mxu0 0
        %534 = vmatpush.bf16.msra.mxu0 0
        %535 = vmatpush.bf16.msra.mxu0 0
        %536 = vmatpush.bf16.msra.mxu0 0
        %537 = vmatpush.bf16.msra.mxu0 0
        %538 = vmatpush.bf16.msra.mxu0 0
        %539 = vmatpush.bf16.msra.mxu0 %v493
        %540 = vmatpush.bf16.msra.mxu0 %v489
        %541 = vmatmul.bf16.gmra.mxu0 %v505
        %v542 = vpop.f32.mrf.mxu0
        %v543 = vadd.f32 0.0, %v542
        %v544 = vpop.f32.mrf.mxu0
        %545 = vdwg.mxu0
        %546 = vmatpush.bf16.msra.mxu0 0
        %547 = vmatpush.bf16.msra.mxu0 0
        %548 = vmatpush.bf16.msra.mxu0 0
        %549 = vmatpush.bf16.msra.mxu0 0
        %550 = vmatpush.bf16.msra.mxu0 0
        %551 = vmatpush.bf16.msra.mxu0 0
        %552 = vmatpush.bf16.msra.mxu0 %v494
        %553 = vmatpush.bf16.msra.mxu0 %v490
        %554 = vmatmul.bf16.gmra.mxu0 %v505
        %v555 = vpop.f32.mrf.mxu0
        %v556 = vadd.f32 0.0, %v555
        %v557 = vpop.f32.mrf.mxu0
        %558 = vdwg.mxu0
        %v559 = vxor.u32 %v517, 2147483648
        %v560 = vxor.u32 %v530, 2147483648
        %v561 = vmul.f32 %v559, 1.442695
        %v562 = vpow.pop %v561
        %v563 = vmul.f32 %v560, 1.442695
        %v564 = vpow.pop %v563
        %v565 = vadd.f32 %v562, 1.0
        %v566 = vadd.f32 %v564, 1.0
        %v567 = vrcp.pop %v565
        %v568 = vmul.f32 %v565, %v567
        %v569 = vsub.f32 1.0, %v568
        %v570 = vmul.f32 %v567, %v569
        %v571 = vadd.f32 %v567, %v570
        %vm572 = vweird.f32 %v565
        %vm573 = vweird.f32 %v567
        %vm574 = vmor %vm572, %vm573
        %v575 = vsel %vm574, %v567, %v571
        %v576 = vand.u32 2147483647, %v565
        %vm577 = vcmp.eq.f32.partialorder %v576, 8.507059e+37
        %v578 = vand.u32 %v565, 2147483648
        %v579 = vor.u32 1.1754944e-38, %v578
        %v580 = vsel %vm577, %v579, %v575
        %v581 = vmul.f32 1.0, %v580
        %v582 = vrcp.pop %v566
        %v583 = vmul.f32 %v566, %v582
        %v584 = vsub.f32 1.0, %v583
        %v585 = vmul.f32 %v582, %v584
        %v586 = vadd.f32 %v582, %v585
        %vm587 = vweird.f32 %v566
        %vm588 = vweird.f32 %v582
        %vm589 = vmor %vm587, %vm588
        %v590 = vsel %vm589, %v582, %v586
        %v591 = vand.u32 2147483647, %v566
        %vm592 = vcmp.eq.f32.partialorder %v591, 8.507059e+37
        %v593 = vand.u32 %v566, 2147483648
        %v594 = vor.u32 1.1754944e-38, %v593
        %v595 = vsel %vm592, %v594, %v590
        %v596 = vmul.f32 1.0, %v595
        %v597 = vmul.f32 %v517, %v581
        %v598 = vmul.f32 %v530, %v596
        %v599 = vmul.f32 %v597, %v543
        %v600 = vmul.f32 %v598, %v556
        %v601 = vld [vmem:[%s365] sm:$0xff]
        %v602 = vpack.c.bf16 %v599, %v599
        %v603 = vpack.c.bf16 %v600, %v600
        %v604 = vld [vmem:[%s428] sm:$0xf]
        %v605 = vld [vmem:[%s428 + $0x4] sm:$0xf]
        %v606 = vld [vmem:[%s428 + $0x8] sm:$0xf]
        %v607 = vld [vmem:[%s428 + $0xc] sm:$0xf]
        %v608 = vld [vmem:[%s428 + $0x10] sm:$0xf]
        %v609 = vld [vmem:[%s428 + $0x14] sm:$0xf]
        %v610 = vld [vmem:[%s428 + $0x18] sm:$0xf]
        %v611 = vld [vmem:[%s428 + $0x1c] sm:$0xf]
        %v612 = vld [vmem:[%s428 + $0x20] sm:$0xf]
        %v613 = vld [vmem:[%s428 + $0x24] sm:$0xf]
        %v614 = vld [vmem:[%s428 + $0x28] sm:$0xf]
        %v615 = vld [vmem:[%s428 + $0x2c] sm:$0xf]
        %v616 = vld [vmem:[%s428 + $0x30] sm:$0xf]
        %v617 = vld [vmem:[%s428 + $0x34] sm:$0xf]
        %v618 = vld [vmem:[%s428 + $0x38] sm:$0xf]
        %v619 = vld [vmem:[%s428 + $0x3c] sm:$0xf]
        %v620 = vld [vmem:[%s428 + $0x40] sm:$0xf]
        %v621 = vld [vmem:[%s428 + $0x44] sm:$0xf]
        %v622 = vld [vmem:[%s428 + $0x48] sm:$0xf]
        %v623 = vld [vmem:[%s428 + $0x4c] sm:$0xf]
        %v624 = vld [vmem:[%s428 + $0x50] sm:$0xf]
        %v625 = vld [vmem:[%s428 + $0x54] sm:$0xf]
        %v626 = vld [vmem:[%s428 + $0x58] sm:$0xf]
        %v627 = vld [vmem:[%s428 + $0x5c] sm:$0xf]
        %v628 = vld [vmem:[%s428 + $0x60] sm:$0xf]
        %v629 = vld [vmem:[%s428 + $0x64] sm:$0xf]
        %v630 = vld [vmem:[%s428 + $0x68] sm:$0xf]
        %v631 = vld [vmem:[%s428 + $0x6c] sm:$0xf]
        %v632 = vld [vmem:[%s428 + $0x70] sm:$0xf]
        %v633 = vld [vmem:[%s428 + $0x74] sm:$0xf]
        %v634 = vld [vmem:[%s428 + $0x78] sm:$0xf]
        %v635 = vld [vmem:[%s428 + $0x7c] sm:$0xf]
        %v668 = vunpack.c.l.b16 %v604
        %v669 = vunpack.c.l.b16 %v605
        %v670 = vunpack.c.l.b16 %v606
        %v671 = vunpack.c.l.b16 %v607
        %v672 = vunpack.c.l.b16 %v608
        %v673 = vunpack.c.l.b16 %v609
        %v674 = vunpack.c.l.b16 %v610
        %v675 = vunpack.c.l.b16 %v611
        %v676 = vunpack.c.l.b16 %v612
        %v677 = vunpack.c.l.b16 %v613
        %v678 = vunpack.c.l.b16 %v614
        %v679 = vunpack.c.l.b16 %v615
        %v680 = vunpack.c.l.b16 %v616
        %v681 = vunpack.c.l.b16 %v617
        %v682 = vunpack.c.l.b16 %v618
        %v683 = vunpack.c.l.b16 %v619
        %v684 = vunpack.c.l.b16 %v620
        %v685 = vunpack.c.l.b16 %v621
        %v686 = vunpack.c.l.b16 %v622
        %v687 = vunpack.c.l.b16 %v623
        %v688 = vunpack.c.l.b16 %v624
        %v689 = vunpack.c.l.b16 %v625
        %v690 = vunpack.c.l.b16 %v626
        %v691 = vunpack.c.l.b16 %v627
        %v692 = vunpack.c.l.b16 %v628
        %v693 = vunpack.c.l.b16 %v629
        %v694 = vunpack.c.l.b16 %v630
        %v695 = vunpack.c.l.b16 %v631
        %v696 = vunpack.c.l.b16 %v632
        %v697 = vunpack.c.l.b16 %v633
        %v698 = vunpack.c.l.b16 %v634
        %v699 = vunpack.c.l.b16 %v635
        %v700 = vpack.c.b16 %v669, %v668
        %v701 = vpack.c.b16 %v671, %v670
        %v702 = vpack.c.b16 %v673, %v672
        %v703 = vpack.c.b16 %v675, %v674
        %v704 = vpack.c.b16 %v677, %v676
        %v705 = vpack.c.b16 %v679, %v678
        %v706 = vpack.c.b16 %v681, %v680
        %v707 = vpack.c.b16 %v683, %v682
        %v708 = vpack.c.b16 %v685, %v684
        %v709 = vpack.c.b16 %v687, %v686
        %v710 = vpack.c.b16 %v689, %v688
        %v711 = vpack.c.b16 %v691, %v690
        %v712 = vpack.c.b16 %v693, %v692
        %v713 = vpack.c.b16 %v695, %v694
        %v714 = vpack.c.b16 %v697, %v696
        %v715 = vpack.c.b16 %v699, %v698
        %732 = vmatpush.bf16.msra.mxu0 %v707
        %733 = vmatpush.bf16.msra.mxu0 %v706
        %734 = vmatpush.bf16.msra.mxu0 %v705
        %735 = vmatpush.bf16.msra.mxu0 %v704
        %736 = vmatpush.bf16.msra.mxu0 %v703
        %737 = vmatpush.bf16.msra.mxu0 %v702
        %738 = vmatpush.bf16.msra.mxu0 %v701
        %739 = vmatpush.bf16.msra.mxu0 %v700
        %740 = vmatmul.bf16.gmra.mxu0 %v602
        %v741 = vpop.f32.mrf.mxu0
        %v742 = vadd.f32 0.0, %v741
        %v743 = vpop.f32.mrf.mxu0
        %744 = vdwg.mxu0
        %745 = vmatpush.bf16.msra.mxu0 %v715
        %746 = vmatpush.bf16.msra.mxu0 %v714
        %747 = vmatpush.bf16.msra.mxu0 %v713
        %748 = vmatpush.bf16.msra.mxu0 %v712
        %749 = vmatpush.bf16.msra.mxu0 %v711
        %750 = vmatpush.bf16.msra.mxu0 %v710
        %751 = vmatpush.bf16.msra.mxu0 %v709
        %752 = vmatpush.bf16.msra.mxu0 %v708
        %753 = vmatmul.bf16.gmra.mxu0 %v603
        %v754 = vpop.f32.mrf.mxu0
        %v755 = vadd.f32 %v742, %v754
        %v756 = vpop.f32.mrf.mxu0
        %757 = vdwg.mxu0
        %v758 = vadd.f32 %v601, %v755
        %759 = vst.msk [vmem:[%s365] sm:$0xff] %vm503, %v758
        %s760 = sand.u32 %s179, 1
        %s761 = scalar_lea.sflag [#allocation3], %s760
        %s762 = sand.u32 %s179, 1
        %s763 = smul.addr %s762, 8
        %s764 = scalar_lea.vmem [#allocation2], %s763
        // Predicated region
        $region37: #{tpu_custom_call.1} parent=31 // pred_check
          %p765 = pneg %p189
        $region38: #{tpu_custom_call.1} parent=31 // pred_check_branch
          %767 = sbr.rel (%p765) target = $region40
        $region39: #{tpu_custom_call.1} parent=31 // pred_region
          %769 = vsyncadd %s761, 0
          %s770 = smul.addr %s21, 8
          %s771 = scalar_lea.hbm %s3, %s770
          %s773 = sshll.u32 %s764, 4
          %s774 = int_to_ptr.vmem [resolvable:$true] %s773
          %s775 = sshll.u32 %s771, 4
          %s776 = int_to_ptr.hbm [resolvable:$true] %s775
          %778 = dma.vmem_to_hbm [thread:$0]  %s774, 128, %s776, %s761
        $region40: #{tpu_custom_call.1} parent=31 // pred_fallthru
          _
      $region32: #{tpu_custom_call.1} parent=5 // pred_fallthru
        _
      %p779 = scmp.le.s32.totalorder 2, %s12
      // Predicated region
      $region41: #{tpu_custom_call.1} parent=5 // pred_check
        %p780 = pneg %p779
      $region42: #{tpu_custom_call.1} parent=5 // pred_check_branch
        %782 = sbr.rel (%p780) target = $region44
      $region43: #{tpu_custom_call.1} parent=5 // pred_region
        %s783 = ssub.s32 %s12, 2
        // Predicated region
        $region45: #{tpu_custom_call.1} parent=43 // pred_check
          %p784 = pneg %p195
        $region46: #{tpu_custom_call.1} parent=43 // pred_check_branch
          %786 = sbr.rel (%p784) target = $region48
        $region47: #{tpu_custom_call.1} parent=43 // pred_region
          %s787 = sand.u32 %s180, 1
          %s788 = scalar_lea.sflag [#allocation3], %s787
          %s789 = sand.u32 %s180, 1
          %s790 = smul.addr %s789, 8
          %s791 = scalar_lea.vmem [#allocation2], %s790
          %793 = dma.done %s788, 128
        $region48: #{tpu_custom_call.1} parent=43 // pred_fallthru
          _
      $region44: #{tpu_custom_call.1} parent=5 // pred_fallthru
        _
    $region6: #{tpu_custom_call.1} parent=1 // loop_footer
      %s16 = sadd.s32 1, %s12
    $region7: #{tpu_custom_call.1} parent=1 // loop_footer_branch
      %11 = sbr.rel target = $region3
    $region8: #{tpu_custom_call.1} parent=1 // loop_exit
      _
    %794 = vsyncpa [#allocation3], 1
    %s795 = scalar_lea.sflag [#allocation3], 1
    %796 = vsyncpa %s795, 1

</llo_original>
